<compile_context>
chip_gen: v6e
topology: v6e:2x2x1
jax: 0.10.0
libtpu: 0.0.40
codegen_flags: <defaults>
</compile_context>

<pallas_src>
import functools

import jax
import jax.numpy as jnp
from jax import lax
from jax.experimental import pallas as pl
from jax.experimental.pallas import tpu as pltpu


def _non_local_kernel(x_ref, w3_ref, wm_ref, o_ref, proj_ref, acc_ref, *,
                      tk, n, n_pad, exp_dtype):
    """One batch element per grid step.

    x_ref   : (1, C, HW)        bf16  input block (HW = 2*n)
    w3_ref  : (3*IC, C)         bf16  [w_phi; w_theta; w_g] stacked 1x1 convs
    wm_ref  : (C, IC)           bf16  conv_mask weight
    o_ref   : (1, C, HW)        f32   output block
    proj_ref: (3, 2, IC, n_pad) bf16  phi/theta/g in the half-split
                                      pseudo-channel layout (torch .view(b,c,-1))
    acc_ref : (2, IC, n_pad)    f32   accumulator for softmax(S) applied to g
    """
    c = x_ref.shape[1]
    hw = x_ref.shape[2]
    ic = c // 2

    w3 = w3_ref[...]                                          # (3*IC, C) bf16

    # ---- fused 1x1-conv projections, one spatial half at a time ----
    for h in range(2):
        xh = x_ref[0, :, h * n:(h + 1) * n]                   # (C, n) bf16
        ph = jnp.dot(w3, xh, preferred_element_type=jnp.float32)   # (3*IC, n)
        for p in range(3):                                    # unrolled at trace
            proj_ref[p, h, :, 0:n] = (
                ph[p * ic:(p + 1) * ic, :].astype(jnp.bfloat16))

    if n_pad > n:
        # padded phi/g columns must be zero so they contribute nothing
        zpad = jnp.zeros((ic, n_pad - n), jnp.bfloat16)
        for p in range(3):
            for h in range(2):
                proj_ref[p, h, :, n:n_pad] = zpad

    acc_ref[...] = jnp.zeros_like(acc_ref)

    if n_pad > n:
        # padded theta columns become padded strip rows: mask before softmax
        row_valid = lax.broadcasted_iota(jnp.int32, (n_pad, 1), 0) < n
    else:
        row_valid = None

    num_tiles = n_pad // tk
    contract_first = (((0,), (0,)), ((), ()))   # depth-IC contraction
    contract_last = (((1,), (1,)), ((), ()))    # NT matmul over the j tile

    # ---- attention, key(j)-tiled: only an (n_pad, tk) strip is ever live ----
    def body(t, carry):
        j0 = pl.multiple_of(t * tk, tk)
        phi0 = proj_ref[0, 0, :, pl.ds(j0, tk)]               # (IC, tk) bf16
        phi1 = proj_ref[0, 1, :, pl.ds(j0, tk)]
        th0 = proj_ref[1, 0, :, :]                            # (IC, n_pad) bf16
        th1 = proj_ref[1, 1, :, :]
        g0 = proj_ref[2, 0, :, pl.ds(j0, tk)]                 # (IC, tk) bf16
        g1 = proj_ref[2, 1, :, pl.ds(j0, tk)]

        # S[i, j] = sum over pseudo-channels (top + bottom half contractions)
        s = lax.dot_general(th0, phi0, contract_first,
                            preferred_element_type=jnp.float32)    # (n_pad, tk)
        s = s + lax.dot_general(th1, phi1, contract_first,
                                preferred_element_type=jnp.float32)
        if row_valid is not None:
            s = jnp.where(row_valid, s, jnp.float32(-1e30))

        # column softmax over i (== nn.Softmax(dim=1)); normalization folded
        # into g's columns: (IC, tk) multiplies instead of (tk, n).
        m = jnp.max(s, axis=0, keepdims=True)                      # (1, tk) f32
        e = jnp.exp((s - m).astype(exp_dtype))                     # (n_pad, tk)
        l = jnp.sum(e.astype(jnp.float32), axis=0, keepdims=True)  # (1, tk) f32
        r = pl.reciprocal(l, approx=True)                          # (1, tk) f32
        e_b = e.astype(jnp.bfloat16)
        gs0 = (g0 * r).astype(jnp.bfloat16)                        # (IC, tk)
        gs1 = (g1 * r).astype(jnp.bfloat16)

        acc_ref[0, :, :] += lax.dot_general(
            gs0, e_b, contract_last, preferred_element_type=jnp.float32)
        acc_ref[1, :, :] += lax.dot_general(
            gs1, e_b, contract_last, preferred_element_type=jnp.float32)
        return carry

    lax.fori_loop(0, num_tiles, body, None,
                  unroll=(2 if num_tiles > 1 else 1))

    # ---- conv_mask + residual; direct lane-dense half writes ----
    wm = wm_ref[...]                                               # (C, IC) bf16
    att0 = jnp.dot(wm, acc_ref[0, :, :].astype(jnp.bfloat16),
                   preferred_element_type=jnp.float32)             # (C, n_pad)
    att1 = jnp.dot(wm, acc_ref[1, :, :].astype(jnp.bfloat16),
                   preferred_element_type=jnp.float32)
    o_ref[0, :, 0:n] = att0[:, 0:n] + x_ref[0, :, 0:n].astype(jnp.float32)
    o_ref[0, :, n:hw] = att1[:, 0:n] + x_ref[0, :, n:hw].astype(jnp.float32)


def _round_up(x, m):
    return ((x + m - 1) // m) * m


def _vmem_capacity_bytes():
    try:
        return int(pltpu.get_tpu_info().vmem_capacity_bytes)
    except Exception:
        return 64 * 1024 * 1024            # conservative fallback (v7x per-core)


def _exp_dtype_for_device():
    # bf16 EUP exists on v6e / v7x; v5e (and older) keep exp in f32.
    try:
        kind = jax.devices()[0].device_kind.lower()
    except Exception:
        return jnp.float32
    if any(tag in kind for tag in ("v6", "v7", "tpu7")):
        return jnp.bfloat16
    return jnp.float32


def non_local_block(x_nchw, w_phi, w_theta, w_g, w_mask):
    """x: (B, C, H, W) f32. w_phi/w_theta/w_g: (C//2, C), w_mask: (C, C//2)."""
    B, C, H, W = x_nchw.shape
    IC = C // 2
    HW = H * W
    assert C % 2 == 0, "NonLocalBlock requires an even channel count"
    assert HW % 2 == 0, "the module's .view(b, c, -1) requires an even H*W"
    n = HW // 2
    n_pad = _round_up(n, 128)

    # x is consumed in bf16 by the MXU anyway; feeding bf16 halves the largest
    # fixed VMEM consumer (the double-buffered x block) and the x HBM traffic.
    x_flat = x_nchw.reshape(B, C, HW).astype(jnp.bfloat16)
    w3 = jnp.concatenate([w_phi, w_theta, w_g], axis=0).astype(jnp.bfloat16)
    wm = w_mask.astype(jnp.bfloat16)

    # ---- generation-aware VMEM budget -> key-tile size tk ----
    vmem_cap = _vmem_capacity_bytes()
    headroom = max(vmem_cap // 8, 4 * 1024 * 1024)
    fixed = (
        2 * (C * HW * 2)                     # x block (bf16, double-buffered)
        + 2 * (C * HW * 4)                   # out block (f32, double-buffered)
        + 2 * (3 * IC * C + C * IC) * 2      # weights (bf16, double-buffered)
        + 3 * C * n_pad * 2                  # proj scratch (bf16)
        + C * n_pad * 4                      # acc scratch (f32)
        + 3 * IC * n_pad * 4                 # per-half projection f32 temp
        + 2 * C * n_pad * 4                  # epilogue f32 temps
    )
    budget = vmem_cap - headroom - fixed

    def strip_bytes(t):
        # s (f32) + exp strip (bf16) + one transient f32 strip, x1.5 for unroll=2
        return int(1.5 * t * n_pad * (4 + 2 + 4))

    tk = 128                                 # always MXU/(8,128)-aligned fallback
    for cand in (512, 384, 256):             # largest fitting 128-multiple wins
        if n_pad % cand == 0 and strip_bytes(cand) <= budget:
            tk = cand
            break

    est_total = fixed + strip_bytes(tk)
    vmem_limit = min(vmem_cap - headroom,    # ~112 MiB on v5e/v6e, ~56 MiB on v7x
                     max(32 * 1024 * 1024, est_total + 4 * 1024 * 1024))
    vmem_limit = int(max(vmem_limit, est_total))   # never clamp below footprint

    kernel = functools.partial(_non_local_kernel, tk=tk, n=n, n_pad=n_pad,
                               exp_dtype=_exp_dtype_for_device())

    out = pl.pallas_call(
        kernel,
        out_shape=jax.ShapeDtypeStruct((B, C, HW), jnp.float32),
        grid_spec=pltpu.PrefetchScalarGridSpec(
            num_scalar_prefetch=0,
            grid=(B,),
            in_specs=[
                pl.BlockSpec((1, C, HW), lambda b: (b, 0, 0)),
                pl.BlockSpec((3 * IC, C), lambda b: (0, 0)),
                pl.BlockSpec((C, IC), lambda b: (0, 0)),
            ],
            out_specs=pl.BlockSpec((1, C, HW), lambda b: (b, 0, 0)),
            scratch_shapes=[
                pltpu.VMEM((3, 2, IC, n_pad), jnp.bfloat16),
                pltpu.VMEM((2, IC, n_pad), jnp.float32),
            ],
        ),
        compiler_params=pltpu.CompilerParams(
            dimension_semantics=("parallel",),
            vmem_limit_bytes=vmem_limit,
        ),
    )(x_flat, w3, wm)

    return out.reshape(B, C, H, W)


def non_local_block_ref(x, w_phi, w_theta, w_g, w_mask):
    """Pure-JAX transcription of the PyTorch forward (incl. quirky views)."""
    b, c, h, w = x.shape
    ic = c // 2
    X = x.reshape(b, c, h * w)
    P = jnp.einsum("oc,bcs->bos", w_phi, X)       # conv_phi, (b, ic, h*w)
    T = jnp.einsum("oc,bcs->bos", w_theta, X)     # conv_theta
    G = jnp.einsum("oc,bcs->bos", w_g, X)         # conv_g
    x_phi = P.reshape(b, c, -1)                   # (b, c, h*w/2)
    x_theta = T.reshape(b, c, -1).transpose(0, 2, 1)
    x_g = G.reshape(b, c, -1).transpose(0, 2, 1)
    M = jnp.einsum("bic,bcj->bij", x_theta, x_phi)
    Msm = jax.nn.softmax(M, axis=1)               # nn.Softmax(dim=1)
    R = jnp.einsum("bij,bjc->bic", Msm, x_g)
    Y = R.transpose(0, 2, 1).reshape(b, ic, h, w)
    att = jnp.einsum("oc,bcs->bos", w_mask, Y.reshape(b, ic, h * w))
    return att.reshape(b, c, h, w) + x


if __name__ == "__main__":
    B, C, H, W = 2, 16, 16, 16
    IC = C // 2

    key = jax.random.PRNGKey(0)
    kx, k1, k2, k3, k4 = jax.random.split(key, 5)
    x = jax.random.normal(kx, (B, C, H, W), dtype=jnp.float32)
    # Deterministic synthetic 1x1-conv weights (out, in); bias=False in module.
    w_phi = jax.random.normal(k1, (IC, C), dtype=jnp.float32) * 0.1
    w_theta = jax.random.normal(k2, (IC, C), dtype=jnp.float32) * 0.1
    w_g = jax.random.normal(k3, (IC, C), dtype=jnp.float32) * 0.1
    w_mask = jax.random.normal(k4, (C, IC), dtype=jnp.float32) * 0.1

    out = non_local_block(x, w_phi, w_theta, w_g, w_mask)
    out = jax.block_until_ready(out)

    ref = non_local_block_ref(x, w_phi, w_theta, w_g, w_mask)
    assert out.shape == (B, C, H, W)
    max_err = jnp.max(jnp.abs(out - ref))
    # bf16 MXU inputs + bf16 residual + approx reciprocal -> bf16-level tolerance.
    assert jnp.allclose(out, ref, atol=2e-2, rtol=2e-2), (
        f"mismatch vs reference, max abs err = {max_err}")

    print("KERNEL_OK")
</pallas_src>

<mosaic_0001>
module attributes {stable_mosaic.version = 11 : i64} {
  func.func @_non_local_kernel(%arg0: i32, %arg1: memref<1x16x256xbf16, #tpu.memory_space<vmem>>, %arg2: memref<24x16xbf16, #tpu.memory_space<vmem>>, %arg3: memref<16x8xbf16, #tpu.memory_space<vmem>>, %arg4: memref<1x16x256xf32, #tpu.memory_space<vmem>>, %arg5: memref<3x2x8x128xbf16, #tpu.memory_space<vmem>>, %arg6: memref<2x8x128xf32, #tpu.memory_space<vmem>>) attributes {dimension_semantics = [#tpu.dimension_semantics<parallel>], iteration_bounds = array<i64: 2>, scalar_prefetch = 0 : i64, scratch_operands = 2 : i64, tpu.core_type = #tpu.core_type<tc>, window_params = [{transform_indices = @transform_0, window_bounds = array<i64: 1, 16, 256>}, {pipeline_mode = #tpu.pipeline_mode<synchronous>, transform_indices = @transform_1, window_bounds = array<i64: 24, 16>}, {pipeline_mode = #tpu.pipeline_mode<synchronous>, transform_indices = @transform_2, window_bounds = array<i64: 16, 8>}, {transform_indices = @transform_3, window_bounds = array<i64: 1, 16, 256>}]} {
    %c0 = arith.constant 0 : index
    %c0_0 = arith.constant 0 : index
    %0 = vector.load %arg2[%c0, %c0_0] : memref<24x16xbf16, #tpu.memory_space<vmem>>, vector<24x16xbf16>
    %c0_1 = arith.constant 0 : index
    %c0_2 = arith.constant 0 : index
    %c0_3 = arith.constant 0 : index
    %1 = vector.load %arg1[%c0_1, %c0_2, %c0_3] : memref<1x16x256xbf16, #tpu.memory_space<vmem>>, vector<1x16x128xbf16>
    %2 = vector.shape_cast %1 : vector<1x16x128xbf16> to vector<16x128xbf16>
    %cst = arith.constant dense<0.000000e+00> : vector<24x128xf32>
    %3 = tpu.matmul %0, %2, %cst {dimension_numbers = #tpu.dot_dimension_numbers<[1], [0], [0], [1], [0, 0, 1, 1], [], []>} : vector<24x16xbf16>, vector<16x128xbf16>, vector<24x128xf32> -> vector<24x128xf32>
    %4 = vector.extract_strided_slice %3 {offsets = [0, 0], sizes = [8, 128], strides = [1, 1]} : vector<24x128xf32> to vector<8x128xf32>
    %5 = arith.truncf %4 : vector<8x128xf32> to vector<8x128xbf16>
    %c0_4 = arith.constant 0 : index
    %c0_5 = arith.constant 0 : index
    %c0_6 = arith.constant 0 : index
    %c0_7 = arith.constant 0 : index
    %6 = vector.load %arg5[%c0_4, %c0_5, %c0_6, %c0_7] : memref<3x2x8x128xbf16, #tpu.memory_space<vmem>>, vector<1x1x8x128xbf16>
    %7 = vector.shape_cast %6 : vector<1x1x8x128xbf16> to vector<8x128xbf16>
    %8 = vector.shape_cast %5 : vector<8x128xbf16> to vector<1x1x8x128xbf16>
    tpu.vector_store %arg5[%c0_4, %c0_5, %c0_6, %c0_7], %8 {strides = array<i32>} : memref<3x2x8x128xbf16, #tpu.memory_space<vmem>>, vector<1x1x8x128xbf16>,
    %9 = vector.extract_strided_slice %3 {offsets = [8, 0], sizes = [8, 128], strides = [1, 1]} : vector<24x128xf32> to vector<8x128xf32>
    %10 = arith.truncf %9 : vector<8x128xf32> to vector<8x128xbf16>
    %c1 = arith.constant 1 : index
    %c0_8 = arith.constant 0 : index
    %c0_9 = arith.constant 0 : index
    %c0_10 = arith.constant 0 : index
    %11 = vector.load %arg5[%c1, %c0_8, %c0_9, %c0_10] : memref<3x2x8x128xbf16, #tpu.memory_space<vmem>>, vector<1x1x8x128xbf16>
    %12 = vector.shape_cast %11 : vector<1x1x8x128xbf16> to vector<8x128xbf16>
    %13 = vector.shape_cast %10 : vector<8x128xbf16> to vector<1x1x8x128xbf16>
    tpu.vector_store %arg5[%c1, %c0_8, %c0_9, %c0_10], %13 {strides = array<i32>} : memref<3x2x8x128xbf16, #tpu.memory_space<vmem>>, vector<1x1x8x128xbf16>,
    %14 = vector.extract_strided_slice %3 {offsets = [16, 0], sizes = [8, 128], strides = [1, 1]} : vector<24x128xf32> to vector<8x128xf32>
    %15 = arith.truncf %14 : vector<8x128xf32> to vector<8x128xbf16>
    %c2 = arith.constant 2 : index
    %c0_11 = arith.constant 0 : index
    %c0_12 = arith.constant 0 : index
    %c0_13 = arith.constant 0 : index
    %16 = vector.load %arg5[%c2, %c0_11, %c0_12, %c0_13] : memref<3x2x8x128xbf16, #tpu.memory_space<vmem>>, vector<1x1x8x128xbf16>
    %17 = vector.shape_cast %16 : vector<1x1x8x128xbf16> to vector<8x128xbf16>
    %18 = vector.shape_cast %15 : vector<8x128xbf16> to vector<1x1x8x128xbf16>
    tpu.vector_store %arg5[%c2, %c0_11, %c0_12, %c0_13], %18 {strides = array<i32>} : memref<3x2x8x128xbf16, #tpu.memory_space<vmem>>, vector<1x1x8x128xbf16>,
    %c0_14 = arith.constant 0 : index
    %c0_15 = arith.constant 0 : index
    %c128 = arith.constant 128 : index
    %19 = vector.load %arg1[%c0_14, %c0_15, %c128] : memref<1x16x256xbf16, #tpu.memory_space<vmem>>, vector<1x16x128xbf16>
    %20 = vector.shape_cast %19 : vector<1x16x128xbf16> to vector<16x128xbf16>
    %cst_16 = arith.constant dense<0.000000e+00> : vector<24x128xf32>
    %21 = tpu.matmul %0, %20, %cst_16 {dimension_numbers = #tpu.dot_dimension_numbers<[1], [0], [0], [1], [0, 0, 1, 1], [], []>} : vector<24x16xbf16>, vector<16x128xbf16>, vector<24x128xf32> -> vector<24x128xf32>
    %22 = vector.extract_strided_slice %21 {offsets = [0, 0], sizes = [8, 128], strides = [1, 1]} : vector<24x128xf32> to vector<8x128xf32>
    %23 = arith.truncf %22 : vector<8x128xf32> to vector<8x128xbf16>
    %c0_17 = arith.constant 0 : index
    %c1_18 = arith.constant 1 : index
    %c0_19 = arith.constant 0 : index
    %c0_20 = arith.constant 0 : index
    %24 = vector.load %arg5[%c0_17, %c1_18, %c0_19, %c0_20] : memref<3x2x8x128xbf16, #tpu.memory_space<vmem>>, vector<1x1x8x128xbf16>
    %25 = vector.shape_cast %24 : vector<1x1x8x128xbf16> to vector<8x128xbf16>
    %26 = vector.shape_cast %23 : vector<8x128xbf16> to vector<1x1x8x128xbf16>
    tpu.vector_store %arg5[%c0_17, %c1_18, %c0_19, %c0_20], %26 {strides = array<i32>} : memref<3x2x8x128xbf16, #tpu.memory_space<vmem>>, vector<1x1x8x128xbf16>,
    %27 = vector.extract_strided_slice %21 {offsets = [8, 0], sizes = [8, 128], strides = [1, 1]} : vector<24x128xf32> to vector<8x128xf32>
    %28 = arith.truncf %27 : vector<8x128xf32> to vector<8x128xbf16>
    %c1_21 = arith.constant 1 : index
    %c1_22 = arith.constant 1 : index
    %c0_23 = arith.constant 0 : index
    %c0_24 = arith.constant 0 : index
    %29 = vector.load %arg5[%c1_21, %c1_22, %c0_23, %c0_24] : memref<3x2x8x128xbf16, #tpu.memory_space<vmem>>, vector<1x1x8x128xbf16>
    %30 = vector.shape_cast %29 : vector<1x1x8x128xbf16> to vector<8x128xbf16>
    %31 = vector.shape_cast %28 : vector<8x128xbf16> to vector<1x1x8x128xbf16>
    tpu.vector_store %arg5[%c1_21, %c1_22, %c0_23, %c0_24], %31 {strides = array<i32>} : memref<3x2x8x128xbf16, #tpu.memory_space<vmem>>, vector<1x1x8x128xbf16>,
    %32 = vector.extract_strided_slice %21 {offsets = [16, 0], sizes = [8, 128], strides = [1, 1]} : vector<24x128xf32> to vector<8x128xf32>
    %33 = arith.truncf %32 : vector<8x128xf32> to vector<8x128xbf16>
    %c2_25 = arith.constant 2 : index
    %c1_26 = arith.constant 1 : index
    %c0_27 = arith.constant 0 : index
    %c0_28 = arith.constant 0 : index
    %34 = vector.load %arg5[%c2_25, %c1_26, %c0_27, %c0_28] : memref<3x2x8x128xbf16, #tpu.memory_space<vmem>>, vector<1x1x8x128xbf16>
    %35 = vector.shape_cast %34 : vector<1x1x8x128xbf16> to vector<8x128xbf16>
    %36 = vector.shape_cast %33 : vector<8x128xbf16> to vector<1x1x8x128xbf16>
    tpu.vector_store %arg5[%c2_25, %c1_26, %c0_27, %c0_28], %36 {strides = array<i32>} : memref<3x2x8x128xbf16, #tpu.memory_space<vmem>>, vector<1x1x8x128xbf16>,
    %cst_29 = arith.constant 0.000000e+00 : f32
    %37 = vector.broadcast %cst_29 : f32 to vector<2x8x128xf32>
    %c0_30 = arith.constant 0 : index
    %c0_31 = arith.constant 0 : index
    %c0_32 = arith.constant 0 : index
    %38 = vector.load %arg6[%c0_30, %c0_31, %c0_32] : memref<2x8x128xf32, #tpu.memory_space<vmem>>, vector<2x8x128xf32>
    tpu.vector_store %arg6[%c0_30, %c0_31, %c0_32], %37 {strides = array<i32>} : memref<2x8x128xf32, #tpu.memory_space<vmem>>, vector<2x8x128xf32>,
    %c0_i32 = arith.constant 0 : i32
    %c128_i32 = arith.constant 128 : i32
    %39 = arith.muli %c0_i32, %c128_i32 : i32
    %40 = tpu.assume_multiple %39, 128 : i32
    %c0_33 = arith.constant 0 : index
    %c0_34 = arith.constant 0 : index
    %c0_35 = arith.constant 0 : index
    %41 = arith.index_cast %40 : i32 to index
    %42 = vector.load %arg5[%c0_33, %c0_34, %c0_35, %41] : memref<3x2x8x128xbf16, #tpu.memory_space<vmem>>, vector<1x1x8x128xbf16>
    %43 = vector.shape_cast %42 : vector<1x1x8x128xbf16> to vector<8x128xbf16>
    %c0_36 = arith.constant 0 : index
    %c1_37 = arith.constant 1 : index
    %c0_38 = arith.constant 0 : index
    %44 = arith.index_cast %40 : i32 to index
    %45 = vector.load %arg5[%c0_36, %c1_37, %c0_38, %44] : memref<3x2x8x128xbf16, #tpu.memory_space<vmem>>, vector<1x1x8x128xbf16>
    %46 = vector.shape_cast %45 : vector<1x1x8x128xbf16> to vector<8x128xbf16>
    %c1_39 = arith.constant 1 : index
    %c0_40 = arith.constant 0 : index
    %c0_41 = arith.constant 0 : index
    %c0_42 = arith.constant 0 : index
    %47 = vector.load %arg5[%c1_39, %c0_40, %c0_41, %c0_42] : memref<3x2x8x128xbf16, #tpu.memory_space<vmem>>, vector<1x1x8x128xbf16>
    %48 = vector.shape_cast %47 : vector<1x1x8x128xbf16> to vector<8x128xbf16>
    %c1_43 = arith.constant 1 : index
    %c1_44 = arith.constant 1 : index
    %c0_45 = arith.constant 0 : index
    %c0_46 = arith.constant 0 : index
    %49 = vector.load %arg5[%c1_43, %c1_44, %c0_45, %c0_46] : memref<3x2x8x128xbf16, #tpu.memory_space<vmem>>, vector<1x1x8x128xbf16>
    %50 = vector.shape_cast %49 : vector<1x1x8x128xbf16> to vector<8x128xbf16>
    %c2_47 = arith.constant 2 : index
    %c0_48 = arith.constant 0 : index
    %c0_49 = arith.constant 0 : index
    %51 = arith.index_cast %40 : i32 to index
    %52 = vector.load %arg5[%c2_47, %c0_48, %c0_49, %51] : memref<3x2x8x128xbf16, #tpu.memory_space<vmem>>, vector<1x1x8x128xbf16>
    %53 = vector.shape_cast %52 : vector<1x1x8x128xbf16> to vector<8x128xbf16>
    %c2_50 = arith.constant 2 : index
    %c1_51 = arith.constant 1 : index
    %c0_52 = arith.constant 0 : index
    %54 = arith.index_cast %40 : i32 to index
    %55 = vector.load %arg5[%c2_50, %c1_51, %c0_52, %54] : memref<3x2x8x128xbf16, #tpu.memory_space<vmem>>, vector<1x1x8x128xbf16>
    %56 = vector.shape_cast %55 : vector<1x1x8x128xbf16> to vector<8x128xbf16>
    %cst_53 = arith.constant dense<0.000000e+00> : vector<128x128xf32>
    %57 = tpu.matmul %48, %43, %cst_53 {dimension_numbers = #tpu.dot_dimension_numbers<[0], [0], [1], [1], [0, 1, 1, 1], [], []>} : vector<8x128xbf16>, vector<8x128xbf16>, vector<128x128xf32> -> vector<128x128xf32>
    %cst_54 = arith.constant dense<0.000000e+00> : vector<128x128xf32>
    %58 = tpu.matmul %50, %46, %cst_54 {dimension_numbers = #tpu.dot_dimension_numbers<[0], [0], [1], [1], [0, 1, 1, 1], [], []>} : vector<8x128xbf16>, vector<8x128xbf16>, vector<128x128xf32> -> vector<128x128xf32>
    %59 = arith.addf %57, %58 : vector<128x128xf32>
    %cst_55 = arith.constant dense<0xFF800000> : vector<128xf32>
    %60 = vector.multi_reduction <maximumf>, %59, %cst_55 [0] : vector<128x128xf32> to vector<128xf32>
    %61 = vector.shape_cast %60 : vector<128xf32> to vector<1x128xf32>
    %62 = vector.broadcast %61 : vector<1x128xf32> to vector<128x128xf32>
    %63 = arith.subf %59, %62 : vector<128x128xf32>
    %64 = math.exp %63 : vector<128x128xf32>
    %cst_56 = arith.constant dense<0.000000e+00> : vector<128xf32>
    %65 = vector.multi_reduction <add>, %64, %cst_56 [0] : vector<128x128xf32> to vector<128xf32>
    %66 = vector.shape_cast %65 : vector<128xf32> to vector<1x128xf32>
    %67 = tpu.reciprocal %66 {approx = true} : vector<1x128xf32> -> vector<1x128xf32>
    %68 = arith.truncf %64 : vector<128x128xf32> to vector<128x128xbf16>
    %69 = arith.extf %53 : vector<8x128xbf16> to vector<8x128xf32>
    %70 = vector.broadcast %67 : vector<1x128xf32> to vector<8x128xf32>
    %71 = arith.mulf %69, %70 : vector<8x128xf32>
    %72 = arith.truncf %71 : vector<8x128xf32> to vector<8x128xbf16>
    %73 = arith.extf %56 : vector<8x128xbf16> to vector<8x128xf32>
    %74 = vector.broadcast %67 : vector<1x128xf32> to vector<8x128xf32>
    %75 = arith.mulf %73, %74 : vector<8x128xf32>
    %76 = arith.truncf %75 : vector<8x128xf32> to vector<8x128xbf16>
    %c0_57 = arith.constant 0 : index
    %c0_58 = arith.constant 0 : index
    %c0_59 = arith.constant 0 : index
    %77 = vector.load %arg6[%c0_57, %c0_58, %c0_59] : memref<2x8x128xf32, #tpu.memory_space<vmem>>, vector<1x8x128xf32>
    %78 = vector.shape_cast %77 : vector<1x8x128xf32> to vector<8x128xf32>
    %cst_60 = arith.constant dense<0.000000e+00> : vector<8x128xf32>
    %79 = tpu.matmul %72, %68, %cst_60 {dimension_numbers = #tpu.dot_dimension_numbers<[1], [1], [0], [0], [0, 0, 1, 0], [], []>} : vector<8x128xbf16>, vector<128x128xbf16>, vector<8x128xf32> -> vector<8x128xf32>
    %80 = arith.addf %78, %79 : vector<8x128xf32>
    %c0_61 = arith.constant 0 : index
    %c0_62 = arith.constant 0 : index
    %c0_63 = arith.constant 0 : index
    %81 = vector.load %arg6[%c0_61, %c0_62, %c0_63] : memref<2x8x128xf32, #tpu.memory_space<vmem>>, vector<1x8x128xf32>
    %82 = vector.shape_cast %81 : vector<1x8x128xf32> to vector<8x128xf32>
    %83 = vector.shape_cast %80 : vector<8x128xf32> to vector<1x8x128xf32>
    tpu.vector_store %arg6[%c0_61, %c0_62, %c0_63], %83 {strides = array<i32>} : memref<2x8x128xf32, #tpu.memory_space<vmem>>, vector<1x8x128xf32>,
    %c1_64 = arith.constant 1 : index
    %c0_65 = arith.constant 0 : index
    %c0_66 = arith.constant 0 : index
    %84 = vector.load %arg6[%c1_64, %c0_65, %c0_66] : memref<2x8x128xf32, #tpu.memory_space<vmem>>, vector<1x8x128xf32>
    %85 = vector.shape_cast %84 : vector<1x8x128xf32> to vector<8x128xf32>
    %cst_67 = arith.constant dense<0.000000e+00> : vector<8x128xf32>
    %86 = tpu.matmul %76, %68, %cst_67 {dimension_numbers = #tpu.dot_dimension_numbers<[1], [1], [0], [0], [0, 0, 1, 0], [], []>} : vector<8x128xbf16>, vector<128x128xbf16>, vector<8x128xf32> -> vector<8x128xf32>
    %87 = arith.addf %85, %86 : vector<8x128xf32>
    %c1_68 = arith.constant 1 : index
    %c0_69 = arith.constant 0 : index
    %c0_70 = arith.constant 0 : index
    %88 = vector.load %arg6[%c1_68, %c0_69, %c0_70] : memref<2x8x128xf32, #tpu.memory_space<vmem>>, vector<1x8x128xf32>
    %89 = vector.shape_cast %88 : vector<1x8x128xf32> to vector<8x128xf32>
    %90 = vector.shape_cast %87 : vector<8x128xf32> to vector<1x8x128xf32>
    tpu.vector_store %arg6[%c1_68, %c0_69, %c0_70], %90 {strides = array<i32>} : memref<2x8x128xf32, #tpu.memory_space<vmem>>, vector<1x8x128xf32>,
    %c1_i32 = arith.constant 1 : i32
    %c0_71 = arith.constant 0 : index
    %c0_72 = arith.constant 0 : index
    %91 = vector.load %arg3[%c0_71, %c0_72] : memref<16x8xbf16, #tpu.memory_space<vmem>>, vector<16x8xbf16>
    %c0_73 = arith.constant 0 : index
    %c0_74 = arith.constant 0 : index
    %c0_75 = arith.constant 0 : index
    %92 = vector.load %arg6[%c0_73, %c0_74, %c0_75] : memref<2x8x128xf32, #tpu.memory_space<vmem>>, vector<1x8x128xf32>
    %93 = vector.shape_cast %92 : vector<1x8x128xf32> to vector<8x128xf32>
    %94 = arith.truncf %93 : vector<8x128xf32> to vector<8x128xbf16>
    %cst_76 = arith.constant dense<0.000000e+00> : vector<16x128xf32>
    %95 = tpu.matmul %91, %94, %cst_76 {dimension_numbers = #tpu.dot_dimension_numbers<[1], [0], [0], [1], [0, 0, 1, 1], [], []>} : vector<16x8xbf16>, vector<8x128xbf16>, vector<16x128xf32> -> vector<16x128xf32>
    %c1_77 = arith.constant 1 : index
    %c0_78 = arith.constant 0 : index
    %c0_79 = arith.constant 0 : index
    %96 = vector.load %arg6[%c1_77, %c0_78, %c0_79] : memref<2x8x128xf32, #tpu.memory_space<vmem>>, vector<1x8x128xf32>
    %97 = vector.shape_cast %96 : vector<1x8x128xf32> to vector<8x128xf32>
    %98 = arith.truncf %97 : vector<8x128xf32> to vector<8x128xbf16>
    %cst_80 = arith.constant dense<0.000000e+00> : vector<16x128xf32>
    %99 = tpu.matmul %91, %98, %cst_80 {dimension_numbers = #tpu.dot_dimension_numbers<[1], [0], [0], [1], [0, 0, 1, 1], [], []>} : vector<16x8xbf16>, vector<8x128xbf16>, vector<16x128xf32> -> vector<16x128xf32>
    %c0_81 = arith.constant 0 : index
    %c0_82 = arith.constant 0 : index
    %c0_83 = arith.constant 0 : index
    %100 = vector.load %arg1[%c0_81, %c0_82, %c0_83] : memref<1x16x256xbf16, #tpu.memory_space<vmem>>, vector<1x16x128xbf16>
    %101 = vector.shape_cast %100 : vector<1x16x128xbf16> to vector<16x128xbf16>
    %102 = arith.extf %101 : vector<16x128xbf16> to vector<16x128xf32>
    %103 = arith.addf %95, %102 : vector<16x128xf32>
    %c0_84 = arith.constant 0 : index
    %c0_85 = arith.constant 0 : index
    %c0_86 = arith.constant 0 : index
    %104 = vector.load %arg4[%c0_84, %c0_85, %c0_86] : memref<1x16x256xf32, #tpu.memory_space<vmem>>, vector<1x16x128xf32>
    %105 = vector.shape_cast %104 : vector<1x16x128xf32> to vector<16x128xf32>
    %106 = vector.shape_cast %103 : vector<16x128xf32> to vector<1x16x128xf32>
    tpu.vector_store %arg4[%c0_84, %c0_85, %c0_86], %106 {strides = array<i32>} : memref<1x16x256xf32, #tpu.memory_space<vmem>>, vector<1x16x128xf32>,
    %c0_87 = arith.constant 0 : index
    %c0_88 = arith.constant 0 : index
    %c128_89 = arith.constant 128 : index
    %107 = vector.load %arg1[%c0_87, %c0_88, %c128_89] : memref<1x16x256xbf16, #tpu.memory_space<vmem>>, vector<1x16x128xbf16>
    %108 = vector.shape_cast %107 : vector<1x16x128xbf16> to vector<16x128xbf16>
    %109 = arith.extf %108 : vector<16x128xbf16> to vector<16x128xf32>
    %110 = arith.addf %99, %109 : vector<16x128xf32>
    %c0_90 = arith.constant 0 : index
    %c0_91 = arith.constant 0 : index
    %c128_92 = arith.constant 128 : index
    %111 = vector.load %arg4[%c0_90, %c0_91, %c128_92] : memref<1x16x256xf32, #tpu.memory_space<vmem>>, vector<1x16x128xf32>
    %112 = vector.shape_cast %111 : vector<1x16x128xf32> to vector<16x128xf32>
    %113 = vector.shape_cast %110 : vector<16x128xf32> to vector<1x16x128xf32>
    tpu.vector_store %arg4[%c0_90, %c0_91, %c128_92], %113 {strides = array<i32>} : memref<1x16x256xf32, #tpu.memory_space<vmem>>, vector<1x16x128xf32>,
    return
  }
  func.func @transform_0(%arg0: i32) -> (i32, i32, i32) {
    %c0_i32 = arith.constant 0 : i32
    %c0_i32_0 = arith.constant 0 : i32
    %c0_i32_1 = arith.constant 0 : i32
    return %arg0, %c0_i32, %c0_i32_0 : i32, i32, i32
  }
  func.func @transform_1(%arg0: i32) -> (i32, i32) {
    %c0_i32 = arith.constant 0 : i32
    %c0_i32_0 = arith.constant 0 : i32
    %c0_i32_1 = arith.constant 0 : i32
    return %c0_i32, %c0_i32_0 : i32, i32
  }
  func.func @transform_2(%arg0: i32) -> (i32, i32) {
    %c0_i32 = arith.constant 0 : i32
    %c0_i32_0 = arith.constant 0 : i32
    %c0_i32_1 = arith.constant 0 : i32
    return %c0_i32, %c0_i32_0 : i32, i32
  }
  func.func @transform_3(%arg0: i32) -> (i32, i32, i32) {
    %c0_i32 = arith.constant 0 : i32
    %c0_i32_0 = arith.constant 0 : i32
    %c0_i32_1 = arith.constant 0 : i32
    return %arg0, %c0_i32, %c0_i32_0 : i32, i32, i32
  }
}

</mosaic_0001>

<llo_original>
// kernel: tpu_custom_call.1
$region0: #{tpu_custom_call.1}
  #allocation0 [shape = 'u32[]', space=smem, size = 0x4, offset = 0x4, fixed_abs, tag = 'smem constant byte address 0x4 - core index']
  #allocation1 [shape = 'u32[144,128]{1,0:T(1,128)}', space=vmem, size = 0x12000, scoped, tag = 'internal scratch']
  #allocation2 [shape = 'bf16[3,2,8,128]{3,2,1,0:T(8,128)(2,1)}', space=vmem, size = 0x3000, scoped, tag = 'scratch operand']
  #allocation3 [shape = 'f32[2,8,128]{2,1,0:T(8,128)}', space=vmem, size = 0x2000, scoped, tag = 'scratch operand']
  %s0 = inlined_call_operand.vmem [shape: bf16[2,16,256], index: 0, kind: input, shape index: {}]
  %s1 = inlined_call_operand.vmem [shape: bf16[24,16], index: 1, kind: input, shape index: {}]
  %s2 = inlined_call_operand.vmem [shape: bf16[16,8], index: 2, kind: input, shape index: {}]
  %s3 = inlined_call_operand.hbm [shape: f32[2,16,256], index: 3, kind: output, shape index: {}]
  %s4 = sld [smem:[#allocation0]]
  $region45: #{tpu_custom_call.1} parent=0
    _
  %s6 = ssub.s32 1, %s4
  %s7 = scalar_select 0, %s6, %s4
  $region1: #{tpu_custom_call.1} parent=0
    #allocation4 [shape = 'u8[32768]{0}', space=vmem, size = 0x8000, scoped, tag = 'output window, operand 0']
    #allocation5 [shape = 's32[2]{0}', space=sflag, size = 0x8, scoped, tag = 'scoped memory for tpu_custom_call.1']
    %8 = vsyncpa [#allocation5], 0
    %s9 = scalar_lea.sflag [#allocation5], 1
    %10 = vsyncpa %s9, 0
    loop: start=0, step=1, limit=4
    $region2: #{tpu_custom_call.1} parent=1 // loop_pre_header
      _
    $region3: #{tpu_custom_call.1} parent=1 // loop_header
      %s12 = sphi 0, %s16
      %p13 = scmp.ge.s32.totalorder %s12, 4
      %s22 = sphi 0, %s24
      %s25 = sphi 0, %s22
      %s26 = sphi 0, %s25
      %s42 = sphi 0, %s26
      %s46 = sphi 0, %s46
      %s48 = sphi 0, %s46
      %s49 = sphi 0, %s48
      %s63 = sphi 0, %s49
      %s67 = sphi 0, %s67
      %s69 = sphi 0, %s67
      %s70 = sphi 0, %s69
      %s84 = sphi 0, %s70
      %s90 = sphi 0, %s92
      %s93 = sphi 0, %s90
      %s94 = sphi 0, %s93
      %s110 = sphi 0, %s94
    $region4: #{tpu_custom_call.1} parent=1 // loop_header_branch
      %15 = sbr.rel (%p13) target = $region8
    $region5: #{tpu_custom_call.1} parent=1 // loop_body
      %s17 = ssub.s32 %s12, 1
      %s18 = ssub.s32 %s12, 2
      %s19 = sadd.s32 %s12, 1
      %s20 = ssub.s32 %s12, %s19
      %p21 = scmp.eq.s32.totalorder %s20, 0
      %s23 = sadd.s32 %s22, 1
      %s24 = scalar_select %p21, %s22, %s23
      %p27 = pneg %p21
      %p28 = scmp.eq.s32.totalorder %s12, 1
      %p29 = por %p27, %p28
      %p30 = scmp.ne.s32.totalorder %s22, %s25
      %p31 = scmp.eq.s32.totalorder %s12, 0
      %p32 = por %p30, %p31
      %p33 = scmp.ne.s32.totalorder %s22, %s25
      %p34 = scmp.eq.s32.totalorder %s17, 1
      %p35 = por %p33, %p34
      %p36 = scmp.ne.s32.totalorder %s25, %s26
      %p37 = scmp.eq.s32.totalorder %s17, 0
      %p38 = por %p36, %p37
      %p39 = scmp.ne.s32.totalorder %s25, %s26
      %p40 = scmp.eq.s32.totalorder %s18, 1
      %p41 = por %p39, %p40
      %p43 = scmp.ne.s32.totalorder %s26, %s42
      %p44 = scmp.eq.s32.totalorder %s18, 0
      %p45 = por %p43, %p44
      %s47 = sadd.s32 %s46, 1
      %p50 = scmp.eq.s32.totalorder %s12, 1
      %p51 = scmp.ne.s32.totalorder %s46, %s48
      %p52 = scmp.eq.s32.totalorder %s12, 0
      %p53 = por %p51, %p52
      %p54 = scmp.ne.s32.totalorder %s46, %s48
      %p55 = scmp.eq.s32.totalorder %s17, 1
      %p56 = por %p54, %p55
      %p57 = scmp.ne.s32.totalorder %s48, %s49
      %p58 = scmp.eq.s32.totalorder %s17, 0
      %p59 = por %p57, %p58
      %p60 = scmp.ne.s32.totalorder %s48, %s49
      %p61 = scmp.eq.s32.totalorder %s18, 1
      %p62 = por %p60, %p61
      %p64 = scmp.ne.s32.totalorder %s49, %s63
      %p65 = scmp.eq.s32.totalorder %s18, 0
      %p66 = por %p64, %p65
      %s68 = sadd.s32 %s67, 1
      %p71 = scmp.eq.s32.totalorder %s12, 1
      %p72 = scmp.ne.s32.totalorder %s67, %s69
      %p73 = scmp.eq.s32.totalorder %s12, 0
      %p74 = por %p72, %p73
      %p75 = scmp.ne.s32.totalorder %s67, %s69
      %p76 = scmp.eq.s32.totalorder %s17, 1
      %p77 = por %p75, %p76
      %p78 = scmp.ne.s32.totalorder %s69, %s70
      %p79 = scmp.eq.s32.totalorder %s17, 0
      %p80 = por %p78, %p79
      %p81 = scmp.ne.s32.totalorder %s69, %s70
      %p82 = scmp.eq.s32.totalorder %s18, 1
      %p83 = por %p81, %p82
      %p85 = scmp.ne.s32.totalorder %s70, %s84
      %p86 = scmp.eq.s32.totalorder %s18, 0
      %p87 = por %p85, %p86
      %s88 = ssub.s32 %s12, %s19
      %p89 = scmp.eq.s32.totalorder %s88, 0
      %s91 = sadd.s32 %s90, 1
      %s92 = scalar_select %p89, %s90, %s91
      %p95 = pneg %p89
      %p96 = scmp.eq.s32.totalorder %s12, 1
      %p97 = por %p95, %p96
      %p98 = scmp.ne.s32.totalorder %s90, %s93
      %p99 = scmp.eq.s32.totalorder %s12, 0
      %p100 = por %p98, %p99
      %p101 = scmp.ne.s32.totalorder %s90, %s93
      %p102 = scmp.eq.s32.totalorder %s17, 1
      %p103 = por %p101, %p102
      %p104 = scmp.ne.s32.totalorder %s93, %s94
      %p105 = scmp.eq.s32.totalorder %s17, 0
      %p106 = por %p104, %p105
      %p107 = scmp.ne.s32.totalorder %s93, %s94
      %p108 = scmp.eq.s32.totalorder %s18, 1
      %p109 = por %p107, %p108
      %p111 = scmp.ne.s32.totalorder %s94, %s110
      %p112 = scmp.eq.s32.totalorder %s18, 0
      %p113 = por %p111, %p112
      %p114 = scmp.le.s32.totalorder 1, %s12
      %p115 = scmp.lt.s32.totalorder %s12, 3
      %p116 = pnand %p114, %p115
      %p117 = pneg %p116
      // Predicated region
      $region9: #{tpu_custom_call.1} parent=5 // pred_check
        _
      $region10: #{tpu_custom_call.1} parent=5 // pred_check_branch
        %119 = sbr.rel (%p116) target = $region12
      $region11: #{tpu_custom_call.1} parent=5 // pred_region
        %s120 = ssub.s32 %s12, 1
        // Predicated region
        $region13: #{tpu_custom_call.1} parent=11 // pred_check
          %p121 = pneg %p59
        $region14: #{tpu_custom_call.1} parent=11 // pred_check_branch
          %123 = sbr.rel (%p121) target = $region16
        $region15: #{tpu_custom_call.1} parent=11 // pred_region
          _
        $region16: #{tpu_custom_call.1} parent=11 // pred_fallthru
          _
        // Predicated region
        $region17: #{tpu_custom_call.1} parent=11 // pred_check
          %p124 = pneg %p80
        $region18: #{tpu_custom_call.1} parent=11 // pred_check_branch
          %126 = sbr.rel (%p124) target = $region20
        $region19: #{tpu_custom_call.1} parent=11 // pred_region
          _
        $region20: #{tpu_custom_call.1} parent=11 // pred_fallthru
          _
      $region12: #{tpu_custom_call.1} parent=5 // pred_fallthru
        _
      %p127 = scmp.lt.s32.totalorder %s12, 2
      // Predicated region
      $region21: #{tpu_custom_call.1} parent=5 // pred_check
        %p128 = pneg %p127
      $region22: #{tpu_custom_call.1} parent=5 // pred_check_branch
        %130 = sbr.rel (%p128) target = $region24
      $region23: #{tpu_custom_call.1} parent=5 // pred_region
        // Predicated region
        $region25: #{tpu_custom_call.1} parent=23 // pred_check
          %p131 = pneg %p32
        $region26: #{tpu_custom_call.1} parent=23 // pred_check_branch
          %133 = sbr.rel (%p131) target = $region28
        $region27: #{tpu_custom_call.1} parent=23 // pred_region
          %p134 = scmp.lt.s32.totalorder %s12, 1
          %s135 = scalar_select %p134, %s12, 1
          %s136 = smul.addr %s135, 4
          %s137 = smul.addr %s136, 4
          %s138 = scalar_lea.vmem %s0, %s137
        $region28: #{tpu_custom_call.1} parent=23 // pred_fallthru
          _
      $region24: #{tpu_custom_call.1} parent=5 // pred_fallthru
        _
      %p139 = scmp.le.s32.totalorder 1, %s12
      %p140 = scmp.lt.s32.totalorder %s12, 3
      %p141 = pnand %p139, %p140
      %p142 = pneg %p141
      // Predicated region
      $region29: #{tpu_custom_call.1} parent=5 // pred_check
        _
      $region30: #{tpu_custom_call.1} parent=5 // pred_check_branch
        %144 = sbr.rel (%p141) target = $region32
      $region31: #{tpu_custom_call.1} parent=5 // pred_region
        %s145 = ssub.s32 %s12, 1
        %p146 = scmp.lt.s32.totalorder %s17, 1
        %s147 = scalar_select %p146, %s17, 1
        %s148 = smul.addr %s147, 4
        %s149 = smul.addr %s148, 4
        %s150 = scalar_lea.vmem %s0, %s149
        %p151 = pneg %p38
        %p152 = pneg %p35
        %p153 = pneg %p59
        %p154 = pneg %p56
        %p155 = pneg %p80
        %p156 = pneg %p77
        %p157 = pneg %p106
        %p158 = pneg %p103
        %s159 = sand.u32 %s93, 1
        %s160 = scalar_lea.sflag [#allocation5], %s159
        %s161 = sand.u32 %s93, 1
        %s162 = smul.addr %s161, 32
        %s163 = scalar_lea.vmem [#allocation4], %s162
        %p164 = scmp.lt.s32.totalorder %s17, 1
        %s165 = scalar_select %p164, %s17, 1
        %s166 = smul.addr %s165, 4
        %s167 = smul.addr %s166, 4
        %s168 = scalar_lea.vmem %s0, %s167
        %v170 = vld [vmem:[%s1] sm:$0xf]
        %v171 = vld [vmem:[%s1 + $0x4] sm:$0xf]
        %v172 = vld [vmem:[%s1 + $0x8] sm:$0xf]
        %v173 = vld [vmem:[%s168] sm:$0xf]
        %v174 = vld [vmem:[%s168 + $0x8] sm:$0xf]
        %v178 = vunpack.c.l.b16 %v170
        %v179 = vunpack.c.l.b16 %v171
        %v180 = vunpack.c.l.b16 %v172
        %v181 = vpack.c.b16 %v179, %v178
        %v182 = vpack.c.b16 %v180, %v180
        %v185 = vunpack.c.l.b16 %v173
        %v186 = vunpack.c.l.b16 %v174
        %v187 = vpack.c.b16 %v186, %v185
        %vm189 = vcmask 130048
        %v191 = vsel %vm189, %v181, 0
        %v194 = vsel %vm189, %v182, 0
        %196 = vmatprep.subr.bf16.mxu0 0
        %197 = vmatpush1.bf16.msra.mxu0 0
        %198 = vmatprep.subr.bf16.mxu0 0
        %199 = vmatpush1.bf16.msra.mxu0 0
        %200 = vmatprep.subr.bf16.mxu0 0
        %201 = vmatpush1.bf16.msra.mxu0 0
        %202 = vmatprep.subr.bf16.mxu0 0
        %203 = vmatpush1.bf16.msra.mxu0 0
        %204 = vmatprep.subr.bf16.mxu0 0
        %205 = vmatpush1.bf16.msra.mxu0 0
        %206 = vmatprep.subr.bf16.mxu0 0
        %207 = vmatpush1.bf16.msra.mxu0 0
        %208 = vmatprep.subr.bf16.mxu0 0
        %209 = vmatpush1.bf16.msra.mxu0 0
        %210 = vmatprep.subr.bf16.mxu0 0
        %211 = vmatpush1.bf16.msra.mxu0 %v187
        %212 = vmatprep.subr.bf16.mxu0 0
        %213 = vmatpush2.bf16.msra.mxu0 0
        %214 = vmatprep.subr.bf16.mxu0 0
        %215 = vmatpush2.bf16.msra.mxu0 0
        %216 = vmatprep.subr.bf16.mxu0 0
        %217 = vmatpush2.bf16.msra.mxu0 0
        %218 = vmatprep.subr.bf16.mxu0 0
        %219 = vmatpush2.bf16.msra.mxu0 0
        %220 = vmatprep.subr.bf16.mxu0 0
        %221 = vmatpush2.bf16.msra.mxu0 0
        %222 = vmatprep.subr.bf16.mxu0 0
        %223 = vmatpush2.bf16.msra.mxu0 0
        %224 = vmatprep.subr.bf16.mxu0 0
        %225 = vmatpush2.bf16.msra.mxu0 0
        %226 = vmatprep.subr.bf16.mxu0 0
        %227 = vmatpush2.bf16.msra.mxu0 0
        %228 = vmatprep.mubr.bf16.mxu0 0
        %229 = vmatmul.mubr.bf16.gmra.mxu0 %v191
        %v230 = vpop.f32.mrf.mxu0
        %v231 = vadd.f32 0.0, %v230
        %v232 = vpop.f32.mrf.mxu0
        %v233 = vpop.f32.mrf.mxu0
        %v234 = vadd.f32 0.0, %v233
        %v235 = vpop.f32.mrf.mxu0
        %236 = vmatprep.mubr.bf16.mxu0 0
        %237 = vmatmul.mubr.bf16.gmra.mxu0 %v194
        %v238 = vpop.f32.mrf.mxu0
        %v239 = vadd.f32 0.0, %v238
        %v240 = vpop.f32.mrf.mxu0
        %v241 = vpop.f32.mrf.mxu0
        %v242 = vpop.f32.mrf.mxu0
        %243 = vdwg.mxu0
        %v244 = vpack.c.bf16 %v231, %v231
        %245 = vst [vmem:[#allocation2] sm:$0xf] %v244
        %v246 = vpack.c.bf16 %v234, %v234
        %s247 = scalar_lea.vmem [#allocation2], 8
        %248 = vst [vmem:[%s247] sm:$0xf] %v246
        %v249 = vpack.c.bf16 %v239, %v239
        %s250 = scalar_lea.vmem [#allocation2], 16
        %251 = vst [vmem:[%s250] sm:$0xf] %v249
        %v252 = vld [vmem:[%s168 + $0x4] sm:$0xf]
        %v253 = vld [vmem:[%s168 + $0xc] sm:$0xf]
        %v256 = vunpack.c.l.b16 %v252
        %v257 = vunpack.c.l.b16 %v253
        %v258 = vpack.c.b16 %v257, %v256
        %260 = vmatprep.subr.bf16.mxu0 0
        %261 = vmatpush1.bf16.msra.mxu0 0
        %262 = vmatprep.subr.bf16.mxu0 0
        %263 = vmatpush1.bf16.msra.mxu0 0
        %264 = vmatprep.subr.bf16.mxu0 0
        %265 = vmatpush1.bf16.msra.mxu0 0
        %266 = vmatprep.subr.bf16.mxu0 0
        %267 = vmatpush1.bf16.msra.mxu0 0
        %268 = vmatprep.subr.bf16.mxu0 0
        %269 = vmatpush1.bf16.msra.mxu0 0
        %270 = vmatprep.subr.bf16.mxu0 0
        %271 = vmatpush1.bf16.msra.mxu0 0
        %272 = vmatprep.subr.bf16.mxu0 0
        %273 = vmatpush1.bf16.msra.mxu0 0
        %274 = vmatprep.subr.bf16.mxu0 0
        %275 = vmatpush1.bf16.msra.mxu0 %v258
        %276 = vmatprep.subr.bf16.mxu0 0
        %277 = vmatpush2.bf16.msra.mxu0 0
        %278 = vmatprep.subr.bf16.mxu0 0
        %279 = vmatpush2.bf16.msra.mxu0 0
        %280 = vmatprep.subr.bf16.mxu0 0
        %281 = vmatpush2.bf16.msra.mxu0 0
        %282 = vmatprep.subr.bf16.mxu0 0
        %283 = vmatpush2.bf16.msra.mxu0 0
        %284 = vmatprep.subr.bf16.mxu0 0
        %285 = vmatpush2.bf16.msra.mxu0 0
        %286 = vmatprep.subr.bf16.mxu0 0
        %287 = vmatpush2.bf16.msra.mxu0 0
        %288 = vmatprep.subr.bf16.mxu0 0
        %289 = vmatpush2.bf16.msra.mxu0 0
        %290 = vmatprep.subr.bf16.mxu0 0
        %291 = vmatpush2.bf16.msra.mxu0 0
        %292 = vmatprep.mubr.bf16.mxu0 0
        %293 = vmatmul.mubr.bf16.gmra.mxu0 %v191
        %v294 = vpop.f32.mrf.mxu0
        %v295 = vadd.f32 0.0, %v294
        %v296 = vpop.f32.mrf.mxu0
        %v297 = vpop.f32.mrf.mxu0
        %v298 = vadd.f32 0.0, %v297
        %v299 = vpop.f32.mrf.mxu0
        %300 = vmatprep.mubr.bf16.mxu0 0
        %301 = vmatmul.mubr.bf16.gmra.mxu0 %v194
        %v302 = vpop.f32.mrf.mxu0
        %v303 = vadd.f32 0.0, %v302
        %v304 = vpop.f32.mrf.mxu0
        %v305 = vpop.f32.mrf.mxu0
        %v306 = vpop.f32.mrf.mxu0
        %307 = vdwg.mxu0
        %v308 = vpack.c.bf16 %v295, %v295
        %s309 = scalar_lea.vmem [#allocation2], 4
        %310 = vst [vmem:[%s309] sm:$0xf] %v308
        %v311 = vpack.c.bf16 %v298, %v298
        %s312 = scalar_lea.vmem [#allocation2], 12
        %313 = vst [vmem:[%s312] sm:$0xf] %v311
        %v314 = vpack.c.bf16 %v303, %v303
        %s315 = scalar_lea.vmem [#allocation2], 20
        %316 = vst [vmem:[%s315] sm:$0xf] %v314
        %317 = vst [vmem:[#allocation3] sm:$0xff] 0.0
        %318 = vst [vmem:[#allocation3 + $0x8] sm:$0xff] 0.0
        %v319 = vld [vmem:[#allocation2] sm:$0xf]
        %s320 = sadd.s32 0, 1
        %s321 = smul.addr %s320, 4
        %s322 = scalar_lea.vmem [#allocation2], %s321
        %v323 = vld [vmem:[%s322] sm:$0xf]
        %v324 = vld [vmem:[%s247] sm:$0xf]
        %v325 = vld [vmem:[%s312] sm:$0xf]
        %s326 = sadd.s32 0, 4
        %s327 = smul.addr %s326, 4
        %s328 = scalar_lea.vmem [#allocation2], %s327
        %v329 = vld [vmem:[%s328] sm:$0xf]
        %s330 = sadd.s32 %s320, 4
        %s331 = smul.addr %s330, 4
        %s332 = scalar_lea.vmem [#allocation2], %s331
        %v333 = vld [vmem:[%s332] sm:$0xf]
        %334 = vxpose.xlu0.c.b16.start [1/8] %v325, 128
        %335 = vxpose.xlu0.c.b16.cont [2/8] 0, 128
        %336 = vxpose.xlu0.c.b16.cont [3/8] 0, 128
        %337 = vxpose.xlu0.c.b16.cont [4/8] 0, 128
        %338 = vxpose.xlu0.c.b16.cont [5/8] 0, 128
        %339 = vxpose.xlu0.c.b16.cont [6/8] 0, 128
        %340 = vxpose.xlu0.c.b16.cont [7/8] 0, 128
        %341 = vxpose.xlu0.c.b16.end [8/8] 0, 128
        %v342 = vpop.trf.xlu0
        %v343 = vpop.trf.xlu0
        %v344 = vpop.trf.xlu0
        %v345 = vpop.trf.xlu0
        %v346 = vpop.trf.xlu0
        %v347 = vpop.trf.xlu0
        %v348 = vpop.trf.xlu0
        %v349 = vpop.trf.xlu0
        %vm350 = vcmask 64512
        %v352 = vsel %vm350, %v342, 0
        %v355 = vsel %vm350, %v343, 0
        %v358 = vsel %vm350, %v344, 0
        %v361 = vsel %vm350, %v345, 0
        %v364 = vsel %vm350, %v346, 0
        %v367 = vsel %vm350, %v347, 0
        %v370 = vsel %vm350, %v348, 0
        %v373 = vsel %vm350, %v349, 0
        %vm375 = vcmask 1043456
        %v377 = vsel %vm375, %v323, 0
        %379 = vmatprep.subr.bf16.mxu0 0
        %380 = vmatpush1.bf16.msra.mxu0 0
        %381 = vmatprep.subr.bf16.mxu0 0
        %382 = vmatpush1.bf16.msra.mxu0 0
        %383 = vmatprep.subr.bf16.mxu0 0
        %384 = vmatpush1.bf16.msra.mxu0 0
        %385 = vmatprep.subr.bf16.mxu0 0
        %386 = vmatpush1.bf16.msra.mxu0 0
        %387 = vmatprep.subr.bf16.mxu0 0
        %388 = vmatpush1.bf16.msra.mxu0 0
        %389 = vmatprep.subr.bf16.mxu0 0
        %390 = vmatpush1.bf16.msra.mxu0 0
        %391 = vmatprep.subr.bf16.mxu0 0
        %392 = vmatpush1.bf16.msra.mxu0 0
        %393 = vmatprep.subr.bf16.mxu0 0
        %394 = vmatpush1.bf16.msra.mxu0 %v377
        %395 = vmatprep.subr.bf16.mxu0 0
        %396 = vmatpush2.bf16.msra.mxu0 0
        %397 = vmatprep.subr.bf16.mxu0 0
        %398 = vmatpush2.bf16.msra.mxu0 0
        %399 = vmatprep.subr.bf16.mxu0 0
        %400 = vmatpush2.bf16.msra.mxu0 0
        %401 = vmatprep.subr.bf16.mxu0 0
        %402 = vmatpush2.bf16.msra.mxu0 0
        %403 = vmatprep.subr.bf16.mxu0 0
        %404 = vmatpush2.bf16.msra.mxu0 0
        %405 = vmatprep.subr.bf16.mxu0 0
        %406 = vmatpush2.bf16.msra.mxu0 0
        %407 = vmatprep.subr.bf16.mxu0 0
        %408 = vmatpush2.bf16.msra.mxu0 0
        %409 = vmatprep.subr.bf16.mxu0 0
        %410 = vmatpush2.bf16.msra.mxu0 0
        %411 = vmatprep.mubr.bf16.mxu0 0
        %412 = vmatmul.mubr.bf16.gmra.mxu0 %v352
        %v413 = vpop.f32.mrf.mxu0
        %v414 = vadd.f32 0.0, %v413
        %v415 = vpop.f32.mrf.mxu0
        %v416 = vpop.f32.mrf.mxu0
        %v417 = vadd.f32 0.0, %v416
        %v418 = vpop.f32.mrf.mxu0
        %419 = vmatprep.mubr.bf16.mxu0 0
        %420 = vmatmul.mubr.bf16.gmra.mxu0 %v355
        %v421 = vpop.f32.mrf.mxu0
        %v422 = vadd.f32 0.0, %v421
        %v423 = vpop.f32.mrf.mxu0
        %v424 = vpop.f32.mrf.mxu0
        %v425 = vadd.f32 0.0, %v424
        %v426 = vpop.f32.mrf.mxu0
        %427 = vmatprep.mubr.bf16.mxu0 0
        %428 = vmatmul.mubr.bf16.gmra.mxu0 %v358
        %v429 = vpop.f32.mrf.mxu0
        %v430 = vadd.f32 0.0, %v429
        %v431 = vpop.f32.mrf.mxu0
        %v432 = vpop.f32.mrf.mxu0
        %v433 = vadd.f32 0.0, %v432
        %v434 = vpop.f32.mrf.mxu0
        %435 = vmatprep.mubr.bf16.mxu0 0
        %436 = vmatmul.mubr.bf16.gmra.mxu0 %v361
        %v437 = vpop.f32.mrf.mxu0
        %v438 = vadd.f32 0.0, %v437
        %v439 = vpop.f32.mrf.mxu0
        %v440 = vpop.f32.mrf.mxu0
        %v441 = vadd.f32 0.0, %v440
        %v442 = vpop.f32.mrf.mxu0
        %443 = vmatprep.mubr.bf16.mxu0 0
        %444 = vmatmul.mubr.bf16.gmra.mxu0 %v364
        %v445 = vpop.f32.mrf.mxu0
        %v446 = vadd.f32 0.0, %v445
        %v447 = vpop.f32.mrf.mxu0
        %v448 = vpop.f32.mrf.mxu0
        %v449 = vadd.f32 0.0, %v448
        %v450 = vpop.f32.mrf.mxu0
        %451 = vmatprep.mubr.bf16.mxu0 0
        %452 = vmatmul.mubr.bf16.gmra.mxu0 %v367
        %v453 = vpop.f32.mrf.mxu0
        %v454 = vadd.f32 0.0, %v453
        %v455 = vpop.f32.mrf.mxu0
        %v456 = vpop.f32.mrf.mxu0
        %v457 = vadd.f32 0.0, %v456
        %v458 = vpop.f32.mrf.mxu0
        %459 = vmatprep.mubr.bf16.mxu0 0
        %460 = vmatmul.mubr.bf16.gmra.mxu0 %v370
        %v461 = vpop.f32.mrf.mxu0
        %v462 = vadd.f32 0.0, %v461
        %v463 = vpop.f32.mrf.mxu0
        %v464 = vpop.f32.mrf.mxu0
        %v465 = vadd.f32 0.0, %v464
        %v466 = vpop.f32.mrf.mxu0
        %467 = vmatprep.mubr.bf16.mxu0 0
        %468 = vmatmul.mubr.bf16.gmra.mxu0 %v373
        %v469 = vpop.f32.mrf.mxu0
        %v470 = vadd.f32 0.0, %v469
        %v471 = vpop.f32.mrf.mxu0
        %v472 = vpop.f32.mrf.mxu0
        %v473 = vadd.f32 0.0, %v472
        %v474 = vpop.f32.mrf.mxu0
        %475 = vdwg.mxu0
        %476 = vxpose.xlu0.c.b16.start [1/8] %v324, 128
        %477 = vxpose.xlu0.c.b16.cont [2/8] 0, 128
        %478 = vxpose.xlu0.c.b16.cont [3/8] 0, 128
        %479 = vxpose.xlu0.c.b16.cont [4/8] 0, 128
        %480 = vxpose.xlu0.c.b16.cont [5/8] 0, 128
        %481 = vxpose.xlu0.c.b16.cont [6/8] 0, 128
        %482 = vxpose.xlu0.c.b16.cont [7/8] 0, 128
        %483 = vxpose.xlu0.c.b16.end [8/8] 0, 128
        %v484 = vpop.trf.xlu0
        %v485 = vpop.trf.xlu0
        %v486 = vpop.trf.xlu0
        %v487 = vpop.trf.xlu0
        %v488 = vpop.trf.xlu0
        %v489 = vpop.trf.xlu0
        %v490 = vpop.trf.xlu0
        %v491 = vpop.trf.xlu0
        %v493 = vsel %vm350, %v484, 0
        %v496 = vsel %vm350, %v485, 0
        %v499 = vsel %vm350, %v486, 0
        %v502 = vsel %vm350, %v487, 0
        %v505 = vsel %vm350, %v488, 0
        %v508 = vsel %vm350, %v489, 0
        %v511 = vsel %vm350, %v490, 0
        %v514 = vsel %vm350, %v491, 0
        %v517 = vsel %vm375, %v319, 0
        %519 = vmatprep.subr.bf16.mxu0 0
        %520 = vmatpush1.bf16.msra.mxu0 0
        %521 = vmatprep.subr.bf16.mxu0 0
        %522 = vmatpush1.bf16.msra.mxu0 0
        %523 = vmatprep.subr.bf16.mxu0 0
        %524 = vmatpush1.bf16.msra.mxu0 0
        %525 = vmatprep.subr.bf16.mxu0 0
        %526 = vmatpush1.bf16.msra.mxu0 0
        %527 = vmatprep.subr.bf16.mxu0 0
        %528 = vmatpush1.bf16.msra.mxu0 0
        %529 = vmatprep.subr.bf16.mxu0 0
        %530 = vmatpush1.bf16.msra.mxu0 0
        %531 = vmatprep.subr.bf16.mxu0 0
        %532 = vmatpush1.bf16.msra.mxu0 0
        %533 = vmatprep.subr.bf16.mxu0 0
        %534 = vmatpush1.bf16.msra.mxu0 %v517
        %535 = vmatprep.subr.bf16.mxu0 0
        %536 = vmatpush2.bf16.msra.mxu0 0
        %537 = vmatprep.subr.bf16.mxu0 0
        %538 = vmatpush2.bf16.msra.mxu0 0
        %539 = vmatprep.subr.bf16.mxu0 0
        %540 = vmatpush2.bf16.msra.mxu0 0
        %541 = vmatprep.subr.bf16.mxu0 0
        %542 = vmatpush2.bf16.msra.mxu0 0
        %543 = vmatprep.subr.bf16.mxu0 0
        %544 = vmatpush2.bf16.msra.mxu0 0
        %545 = vmatprep.subr.bf16.mxu0 0
        %546 = vmatpush2.bf16.msra.mxu0 0
        %547 = vmatprep.subr.bf16.mxu0 0
        %548 = vmatpush2.bf16.msra.mxu0 0
        %549 = vmatprep.subr.bf16.mxu0 0
        %550 = vmatpush2.bf16.msra.mxu0 0
        %551 = vmatprep.mubr.bf16.mxu0 0
        %552 = vmatmul.mubr.bf16.gmra.mxu0 %v493
        %v553 = vpop.f32.mrf.mxu0
        %v554 = vadd.f32 %v414, %v553
        %v555 = vpop.f32.mrf.mxu0
        %v556 = vpop.f32.mrf.mxu0
        %v557 = vadd.f32 %v417, %v556
        %v558 = vpop.f32.mrf.mxu0
        %559 = vmatprep.mubr.bf16.mxu0 0
        %560 = vmatmul.mubr.bf16.gmra.mxu0 %v496
        %v561 = vpop.f32.mrf.mxu0
        %v562 = vadd.f32 %v422, %v561
        %v563 = vpop.f32.mrf.mxu0
        %v564 = vpop.f32.mrf.mxu0
        %v565 = vadd.f32 %v425, %v564
        %v566 = vpop.f32.mrf.mxu0
        %567 = vmatprep.mubr.bf16.mxu0 0
        %568 = vmatmul.mubr.bf16.gmra.mxu0 %v499
        %v569 = vpop.f32.mrf.mxu0
        %v570 = vadd.f32 %v430, %v569
        %v571 = vpop.f32.mrf.mxu0
        %v572 = vpop.f32.mrf.mxu0
        %v573 = vadd.f32 %v433, %v572
        %v574 = vpop.f32.mrf.mxu0
        %575 = vmatprep.mubr.bf16.mxu0 0
        %576 = vmatmul.mubr.bf16.gmra.mxu0 %v502
        %v577 = vpop.f32.mrf.mxu0
        %v578 = vadd.f32 %v438, %v577
        %v579 = vpop.f32.mrf.mxu0
        %v580 = vpop.f32.mrf.mxu0
        %v581 = vadd.f32 %v441, %v580
        %v582 = vpop.f32.mrf.mxu0
        %583 = vmatprep.mubr.bf16.mxu0 0
        %584 = vmatmul.mubr.bf16.gmra.mxu0 %v505
        %v585 = vpop.f32.mrf.mxu0
        %v586 = vadd.f32 %v446, %v585
        %v587 = vpop.f32.mrf.mxu0
        %v588 = vpop.f32.mrf.mxu0
        %v589 = vadd.f32 %v449, %v588
        %v590 = vpop.f32.mrf.mxu0
        %591 = vmatprep.mubr.bf16.mxu0 0
        %592 = vmatmul.mubr.bf16.gmra.mxu0 %v508
        %v593 = vpop.f32.mrf.mxu0
        %v594 = vadd.f32 %v454, %v593
        %v595 = vpop.f32.mrf.mxu0
        %v596 = vpop.f32.mrf.mxu0
        %v597 = vadd.f32 %v457, %v596
        %v598 = vpop.f32.mrf.mxu0
        %599 = vmatprep.mubr.bf16.mxu0 0
        %600 = vmatmul.mubr.bf16.gmra.mxu0 %v511
        %v601 = vpop.f32.mrf.mxu0
        %v602 = vadd.f32 %v462, %v601
        %v603 = vpop.f32.mrf.mxu0
        %v604 = vpop.f32.mrf.mxu0
        %v605 = vadd.f32 %v465, %v604
        %v606 = vpop.f32.mrf.mxu0
        %607 = vmatprep.mubr.bf16.mxu0 0
        %608 = vmatmul.mubr.bf16.gmra.mxu0 %v514
        %v609 = vpop.f32.mrf.mxu0
        %v610 = vadd.f32 %v470, %v609
        %v611 = vpop.f32.mrf.mxu0
        %v612 = vpop.f32.mrf.mxu0
        %v613 = vadd.f32 %v473, %v612
        %v614 = vpop.f32.mrf.mxu0
        %615 = vdwg.mxu0
        %v616 = vmax.f32 %v554, %v570
        %v617 = vmax.f32 %v557, %v573
        %v618 = vmax.f32 %v562, %v578
        %v619 = vmax.f32 %v565, %v581
        %v620 = vmax.f32 %v616, %v586
        %v621 = vmax.f32 %v617, %v589
        %v622 = vmax.f32 %v618, %v594
        %v623 = vmax.f32 %v619, %v597
        %v624 = vmax.f32 %v620, %v602
        %v625 = vmax.f32 %v621, %v605
        %v626 = vmax.f32 %v622, %v610
        %v627 = vmax.f32 %v623, %v613
        %v628 = vmax.f32 %v624, %v625
        %v629 = vmax.f32 %v626, %v627
        %v630 = vmax.f32 %v628, %v629
        %v631 = vrot.slane %v630, 4
        %v632 = vmax.f32 %v630, %v631
        %v633 = vrot.slane %v632, 2
        %v634 = vmax.f32 %v632, %v633
        %v635 = vrot.slane %v634, 1
        %v636 = vmax.f32 %v634, %v635
        %v637 = vsub.f32 %v554, %v636
        %v638 = vsub.f32 %v557, %v636
        %v639 = vsub.f32 %v562, %v636
        %v640 = vsub.f32 %v565, %v636
        %v641 = vsub.f32 %v570, %v636
        %v642 = vsub.f32 %v573, %v636
        %v643 = vsub.f32 %v578, %v636
        %v644 = vsub.f32 %v581, %v636
        %v645 = vsub.f32 %v586, %v636
        %v646 = vsub.f32 %v589, %v636
        %v647 = vsub.f32 %v594, %v636
        %v648 = vsub.f32 %v597, %v636
        %v649 = vsub.f32 %v602, %v636
        %v650 = vsub.f32 %v605, %v636
        %v651 = vsub.f32 %v610, %v636
        %v652 = vsub.f32 %v613, %v636
        %v653 = vmul.f32 %v637, 1.442695
        %v654 = vpow.pop %v653
        %v655 = vmul.f32 %v638, 1.442695
        %v656 = vpow.pop %v655
        %v657 = vmul.f32 %v639, 1.442695
        %v658 = vpow.pop %v657
        %v659 = vmul.f32 %v640, 1.442695
        %v660 = vpow.pop %v659
        %v661 = vmul.f32 %v641, 1.442695
        %v662 = vpow.pop %v661
        %v663 = vmul.f32 %v642, 1.442695
        %v664 = vpow.pop %v663
        %v665 = vmul.f32 %v643, 1.442695
        %v666 = vpow.pop %v665
        %v667 = vmul.f32 %v644, 1.442695
        %v668 = vpow.pop %v667
        %v669 = vmul.f32 %v645, 1.442695
        %v670 = vpow.pop %v669
        %v671 = vmul.f32 %v646, 1.442695
        %v672 = vpow.pop %v671
        %v673 = vmul.f32 %v647, 1.442695
        %v674 = vpow.pop %v673
        %v675 = vmul.f32 %v648, 1.442695
        %v676 = vpow.pop %v675
        %v677 = vmul.f32 %v649, 1.442695
        %v678 = vpow.pop %v677
        %v679 = vmul.f32 %v650, 1.442695
        %v680 = vpow.pop %v679
        %v681 = vmul.f32 %v651, 1.442695
        %v682 = vpow.pop %v681
        %v683 = vmul.f32 %v652, 1.442695
        %v684 = vpow.pop %v683
        %v685 = vadd.f32 %v654, %v656
        %v686 = vadd.f32 %v685, %v658
        %v687 = vadd.f32 %v686, %v660
        %v688 = vadd.f32 %v687, %v662
        %v689 = vadd.f32 %v688, %v664
        %v690 = vadd.f32 %v689, %v666
        %v691 = vadd.f32 %v690, %v668
        %v692 = vadd.f32 %v691, %v670
        %v693 = vadd.f32 %v692, %v672
        %v694 = vadd.f32 %v693, %v674
        %v695 = vadd.f32 %v694, %v676
        %v696 = vadd.f32 %v695, %v678
        %v697 = vadd.f32 %v696, %v680
        %v698 = vadd.f32 %v697, %v682
        %v699 = vadd.f32 %v698, %v684
        %v700 = vrot.slane %v699, 4
        %v701 = vadd.f32 %v699, %v700
        %v702 = vrot.slane %v701, 2
        %v703 = vadd.f32 %v701, %v702
        %v704 = vrot.slane %v703, 1
        %v705 = vadd.f32 %v703, %v704
        %v706 = vrcp.pop %v705
        %v707 = vpack.c.bf16 %v656, %v654
        %v708 = vpack.c.bf16 %v660, %v658
        %v709 = vpack.c.bf16 %v664, %v662
        %v710 = vpack.c.bf16 %v668, %v666
        %v711 = vpack.c.bf16 %v672, %v670
        %v712 = vpack.c.bf16 %v676, %v674
        %v713 = vpack.c.bf16 %v680, %v678
        %v714 = vpack.c.bf16 %v684, %v682
        %v715 = vunpack.c.l.bf16 %v329
        %v716 = vmul.f32 %v715, %v706
        %v717 = vpack.c.bf16 %v716, %v716
        %v718 = vunpack.c.l.bf16 %v333
        %v719 = vmul.f32 %v718, %v706
        %v720 = vpack.c.bf16 %v719, %v719
        %v721 = vld [vmem:[#allocation3] sm:$0xff]
        %722 = vmatprep.subr.bf16.mxu0 0
        %723 = vmatpush1.bf16.xpose.msra.mxu0 %v714
        %724 = vmatprep.subr.bf16.mxu0 0
        %725 = vmatpush1.bf16.xpose.msra.mxu0 %v713
        %726 = vmatprep.subr.bf16.mxu0 0
        %727 = vmatpush1.bf16.xpose.msra.mxu0 %v712
        %728 = vmatprep.subr.bf16.mxu0 0
        %729 = vmatpush1.bf16.xpose.msra.mxu0 %v711
        %730 = vmatprep.subr.bf16.mxu0 0
        %731 = vmatpush1.bf16.xpose.msra.mxu0 %v710
        %732 = vmatprep.subr.bf16.mxu0 0
        %733 = vmatpush1.bf16.xpose.msra.mxu0 %v709
        %734 = vmatprep.subr.bf16.mxu0 0
        %735 = vmatpush1.bf16.xpose.msra.mxu0 %v708
        %736 = vmatprep.subr.bf16.mxu0 0
        %737 = vmatpush1.bf16.xpose.msra.mxu0 %v707
        %738 = vmatprep.subr.bf16.mxu0 0
        %739 = vmatpush2.bf16.xpose.msra.mxu0 0
        %740 = vmatprep.subr.bf16.mxu0 0
        %741 = vmatpush2.bf16.xpose.msra.mxu0 0
        %742 = vmatprep.subr.bf16.mxu0 0
        %743 = vmatpush2.bf16.xpose.msra.mxu0 0
        %744 = vmatprep.subr.bf16.mxu0 0
        %745 = vmatpush2.bf16.xpose.msra.mxu0 0
        %746 = vmatprep.subr.bf16.mxu0 0
        %747 = vmatpush2.bf16.xpose.msra.mxu0 0
        %748 = vmatprep.subr.bf16.mxu0 0
        %749 = vmatpush2.bf16.xpose.msra.mxu0 0
        %750 = vmatprep.subr.bf16.mxu0 0
        %751 = vmatpush2.bf16.xpose.msra.mxu0 0
        %752 = vmatprep.subr.bf16.mxu0 0
        %753 = vmatpush2.bf16.xpose.msra.mxu0 0
        %754 = vmatprep.mubr.bf16.mxu0 0
        %755 = vmatmul.mubr.bf16.gmra.mxu0 %v717
        %v756 = vpop.f32.mrf.mxu0
        %v757 = vadd.f32 0.0, %v756
        %v758 = vpop.f32.mrf.mxu0
        %v759 = vpop.f32.mrf.mxu0
        %v760 = vpop.f32.mrf.mxu0
        %761 = vdwg.mxu0
        %v762 = vadd.f32 %v721, %v757
        %763 = vst [vmem:[#allocation3] sm:$0xff] %v762
        %s764 = scalar_lea.vmem [#allocation3], 8
        %v765 = vld [vmem:[%s764] sm:$0xff]
        %766 = vmatprep.subr.bf16.mxu0 0
        %767 = vmatpush1.bf16.xpose.msra.mxu0 %v714
        %768 = vmatprep.subr.bf16.mxu0 0
        %769 = vmatpush1.bf16.xpose.msra.mxu0 %v713
        %770 = vmatprep.subr.bf16.mxu0 0
        %771 = vmatpush1.bf16.xpose.msra.mxu0 %v712
        %772 = vmatprep.subr.bf16.mxu0 0
        %773 = vmatpush1.bf16.xpose.msra.mxu0 %v711
        %774 = vmatprep.subr.bf16.mxu0 0
        %775 = vmatpush1.bf16.xpose.msra.mxu0 %v710
        %776 = vmatprep.subr.bf16.mxu0 0
        %777 = vmatpush1.bf16.xpose.msra.mxu0 %v709
        %778 = vmatprep.subr.bf16.mxu0 0
        %779 = vmatpush1.bf16.xpose.msra.mxu0 %v708
        %780 = vmatprep.subr.bf16.mxu0 0
        %781 = vmatpush1.bf16.xpose.msra.mxu0 %v707
        %782 = vmatprep.subr.bf16.mxu0 0
        %783 = vmatpush2.bf16.xpose.msra.mxu0 0
        %784 = vmatprep.subr.bf16.mxu0 0
        %785 = vmatpush2.bf16.xpose.msra.mxu0 0
        %786 = vmatprep.subr.bf16.mxu0 0
        %787 = vmatpush2.bf16.xpose.msra.mxu0 0
        %788 = vmatprep.subr.bf16.mxu0 0
        %789 = vmatpush2.bf16.xpose.msra.mxu0 0
        %790 = vmatprep.subr.bf16.mxu0 0
        %791 = vmatpush2.bf16.xpose.msra.mxu0 0
        %792 = vmatprep.subr.bf16.mxu0 0
        %793 = vmatpush2.bf16.xpose.msra.mxu0 0
        %794 = vmatprep.subr.bf16.mxu0 0
        %795 = vmatpush2.bf16.xpose.msra.mxu0 0
        %796 = vmatprep.subr.bf16.mxu0 0
        %797 = vmatpush2.bf16.xpose.msra.mxu0 0
        %798 = vmatprep.mubr.bf16.mxu0 0
        %799 = vmatmul.mubr.bf16.gmra.mxu0 %v720
        %v800 = vpop.f32.mrf.mxu0
        %v801 = vadd.f32 0.0, %v800
        %v802 = vpop.f32.mrf.mxu0
        %v803 = vpop.f32.mrf.mxu0
        %v804 = vpop.f32.mrf.mxu0
        %805 = vdwg.mxu0
        %v806 = vadd.f32 %v765, %v801
        %807 = vst [vmem:[%s764] sm:$0xff] %v806
        %v808 = vld [vmem:[%s2] sm:$0xf]
        %v809 = vld [vmem:[%s2 + $0x4] sm:$0xf]
        %v810 = vld [vmem:[#allocation3] sm:$0xff]
        %v811 = vpack.c.bf16 %v810, %v810
        %v812 = vld [vmem:[%s764] sm:$0xff]
        %v813 = vpack.c.bf16 %v812, %v812
        %v814 = vld [vmem:[%s168] sm:$0xf]
        %v815 = vld [vmem:[%s168 + $0x8] sm:$0xf]
        %v816 = vunpack.c.l.bf16 %v814
        %v817 = vunpack.c.l.bf16 %v815
        %v820 = vunpack.c.l.b16 %v808
        %v821 = vunpack.c.l.b16 %v809
        %v822 = vpack.c.b16 %v821, %v820
        %v824 = vsel %vm350, %v822, 0
        %v827 = vsel %vm375, %v811, 0
        %829 = vmatprep.subr.bf16.mxu0 0
        %830 = vmatpush1.bf16.msra.mxu0 0
        %831 = vmatprep.subr.bf16.mxu0 0
        %832 = vmatpush1.bf16.msra.mxu0 0
        %833 = vmatprep.subr.bf16.mxu0 0
        %834 = vmatpush1.bf16.msra.mxu0 0
        %835 = vmatprep.subr.bf16.mxu0 0
        %836 = vmatpush1.bf16.msra.mxu0 0
        %837 = vmatprep.subr.bf16.mxu0 0
        %838 = vmatpush1.bf16.msra.mxu0 0
        %839 = vmatprep.subr.bf16.mxu0 0
        %840 = vmatpush1.bf16.msra.mxu0 0
        %841 = vmatprep.subr.bf16.mxu0 0
        %842 = vmatpush1.bf16.msra.mxu0 0
        %843 = vmatprep.subr.bf16.mxu0 0
        %844 = vmatpush1.bf16.msra.mxu0 %v827
        %845 = vmatprep.subr.bf16.mxu0 0
        %846 = vmatpush2.bf16.msra.mxu0 0
        %847 = vmatprep.subr.bf16.mxu0 0
        %848 = vmatpush2.bf16.msra.mxu0 0
        %849 = vmatprep.subr.bf16.mxu0 0
        %850 = vmatpush2.bf16.msra.mxu0 0
        %851 = vmatprep.subr.bf16.mxu0 0
        %852 = vmatpush2.bf16.msra.mxu0 0
        %853 = vmatprep.subr.bf16.mxu0 0
        %854 = vmatpush2.bf16.msra.mxu0 0
        %855 = vmatprep.subr.bf16.mxu0 0
        %856 = vmatpush2.bf16.msra.mxu0 0
        %857 = vmatprep.subr.bf16.mxu0 0
        %858 = vmatpush2.bf16.msra.mxu0 0
        %859 = vmatprep.subr.bf16.mxu0 0
        %860 = vmatpush2.bf16.msra.mxu0 0
        %861 = vmatprep.mubr.bf16.mxu0 0
        %862 = vmatmul.mubr.bf16.gmra.mxu0 %v824
        %v863 = vpop.f32.mrf.mxu0
        %v864 = vadd.f32 %v816, %v863
        %v865 = vpop.f32.mrf.mxu0
        %v866 = vpop.f32.mrf.mxu0
        %v867 = vadd.f32 %v817, %v866
        %v868 = vpop.f32.mrf.mxu0
        %869 = vdwg.mxu0
        %870 = vst [vmem:[%s163] sm:$0xff] %v864
        %871 = vst [vmem:[%s163 + $0x10] sm:$0xff] %v867
        %v872 = vld [vmem:[%s168 + $0x4] sm:$0xf]
        %v873 = vld [vmem:[%s168 + $0xc] sm:$0xf]
        %v874 = vunpack.c.l.bf16 %v872
        %v875 = vunpack.c.l.bf16 %v873
        %v877 = vsel %vm375, %v813, 0
        %879 = vmatprep.subr.bf16.mxu0 0
        %880 = vmatpush1.bf16.msra.mxu0 0
        %881 = vmatprep.subr.bf16.mxu0 0
        %882 = vmatpush1.bf16.msra.mxu0 0
        %883 = vmatprep.subr.bf16.mxu0 0
        %884 = vmatpush1.bf16.msra.mxu0 0
        %885 = vmatprep.subr.bf16.mxu0 0
        %886 = vmatpush1.bf16.msra.mxu0 0
        %887 = vmatprep.subr.bf16.mxu0 0
        %888 = vmatpush1.bf16.msra.mxu0 0
        %889 = vmatprep.subr.bf16.mxu0 0
        %890 = vmatpush1.bf16.msra.mxu0 0
        %891 = vmatprep.subr.bf16.mxu0 0
        %892 = vmatpush1.bf16.msra.mxu0 0
        %893 = vmatprep.subr.bf16.mxu0 0
        %894 = vmatpush1.bf16.msra.mxu0 %v877
        %895 = vmatprep.subr.bf16.mxu0 0
        %896 = vmatpush2.bf16.msra.mxu0 0
        %897 = vmatprep.subr.bf16.mxu0 0
        %898 = vmatpush2.bf16.msra.mxu0 0
        %899 = vmatprep.subr.bf16.mxu0 0
        %900 = vmatpush2.bf16.msra.mxu0 0
        %901 = vmatprep.subr.bf16.mxu0 0
        %902 = vmatpush2.bf16.msra.mxu0 0
        %903 = vmatprep.subr.bf16.mxu0 0
        %904 = vmatpush2.bf16.msra.mxu0 0
        %905 = vmatprep.subr.bf16.mxu0 0
        %906 = vmatpush2.bf16.msra.mxu0 0
        %907 = vmatprep.subr.bf16.mxu0 0
        %908 = vmatpush2.bf16.msra.mxu0 0
        %909 = vmatprep.subr.bf16.mxu0 0
        %910 = vmatpush2.bf16.msra.mxu0 0
        %911 = vmatprep.mubr.bf16.mxu0 0
        %912 = vmatmul.mubr.bf16.gmra.mxu0 %v824
        %v913 = vpop.f32.mrf.mxu0
        %v914 = vadd.f32 %v874, %v913
        %v915 = vpop.f32.mrf.mxu0
        %v916 = vpop.f32.mrf.mxu0
        %v917 = vadd.f32 %v875, %v916
        %v918 = vpop.f32.mrf.mxu0
        %919 = vdwg.mxu0
        %920 = vst [vmem:[%s163 + $0x8] sm:$0xff] %v914
        %921 = vst [vmem:[%s163 + $0x18] sm:$0xff] %v917
        %s922 = sand.u32 %s93, 1
        %s923 = scalar_lea.sflag [#allocation5], %s922
        %s924 = sand.u32 %s93, 1
        %s925 = smul.addr %s924, 32
        %s926 = scalar_lea.vmem [#allocation4], %s925
        // Predicated region
        $region33: #{tpu_custom_call.1} parent=31 // pred_check
          %p927 = pneg %p103
        $region34: #{tpu_custom_call.1} parent=31 // pred_check_branch
          %929 = sbr.rel (%p927) target = $region36
        $region35: #{tpu_custom_call.1} parent=31 // pred_region
          %s931 = ssub.s32 512, 512
          %932 = vsyncadd %s923, %s931
          %s933 = smul.addr %s17, 4
          %s934 = smul.addr %s933, 128
          %s935 = scalar_lea.hbm %s3, %s934
          %s936 = sshll.u32 %s926, 4
          %s937 = int_to_ptr.vmem [resolvable:$true] %s936
          %942 = dma.vmem_to_hbm [thread:$0]  %s937, 512, %s935, %s923, 256, 256, 16
        $region36: #{tpu_custom_call.1} parent=31 // pred_fallthru
          _
      $region32: #{tpu_custom_call.1} parent=5 // pred_fallthru
        _
      %p943 = scmp.le.s32.totalorder 2, %s12
      // Predicated region
      $region37: #{tpu_custom_call.1} parent=5 // pred_check
        %p944 = pneg %p943
      $region38: #{tpu_custom_call.1} parent=5 // pred_check_branch
        %946 = sbr.rel (%p944) target = $region40
      $region39: #{tpu_custom_call.1} parent=5 // pred_region
        %s947 = ssub.s32 %s12, 2
        // Predicated region
        $region41: #{tpu_custom_call.1} parent=39 // pred_check
          %p948 = pneg %p109
        $region42: #{tpu_custom_call.1} parent=39 // pred_check_branch
          %950 = sbr.rel (%p948) target = $region44
        $region43: #{tpu_custom_call.1} parent=39 // pred_region
          %s951 = sand.u32 %s94, 1
          %s952 = scalar_lea.sflag [#allocation5], %s951
          %s953 = sand.u32 %s94, 1
          %s954 = smul.addr %s953, 32
          %s955 = scalar_lea.vmem [#allocation4], %s954
          %956 = dma.done %s952, 512
        $region44: #{tpu_custom_call.1} parent=39 // pred_fallthru
          _
      $region40: #{tpu_custom_call.1} parent=5 // pred_fallthru
        _
    $region6: #{tpu_custom_call.1} parent=1 // loop_footer
      %s16 = sadd.s32 1, %s12
    $region7: #{tpu_custom_call.1} parent=1 // loop_footer_branch
      %11 = sbr.rel target = $region3
    $region8: #{tpu_custom_call.1} parent=1 // loop_exit
      _
    %957 = vsyncpa [#allocation5], 1
    %s958 = scalar_lea.sflag [#allocation5], 1
    %959 = vsyncpa %s958, 1

</llo_original>
